<compile_context>
chip_gen: v7x
topology: tpu7x:2x2x1
jax: 0.10.0
libtpu: 0.0.40
codegen_flags: <defaults>
</compile_context>

<pallas_src>
import functools

import jax
import jax.numpy as jnp
from jax import lax
from jax.experimental import pallas as pl
from jax.experimental.pallas import tpu as pltpu


# Input f32-equivalent bytes under which the whole problem is solved in one kernel.
_FUSED_LIMIT_BYTES = 8 << 20     # keeps in + f32 copy + out well under 32 MiB scoped VMEM
_MAX_TILE_BYTES = 4 << 20        # streaming-path row tile (f32 working bytes)


# ----------------------------------------------------------------------------
# Fused fast path: whole (flattened) tensor in one VMEM block
# ----------------------------------------------------------------------------
def _fused_kernel(x_ref, o_ref):
    x = x_ref[...].astype(jnp.float32)
    mn = jnp.min(x)
    mx = jnp.max(x)
    inv = 1.0 / (mx - mn)                      # inf for constant input -> 0*inf = NaN (== torch 0/0)
    o_ref[...] = ((x - mn) * inv).astype(o_ref.dtype)


# ----------------------------------------------------------------------------
# Streaming pass 1: per-slice global min / max over row tiles
#   grid = (num_slices, tiles_per_slice); outer axis "parallel" (v7x 2-TC shard),
#   inner axis "arbitrary" with resident (1,1,1) accumulator blocks per slice.
# ----------------------------------------------------------------------------
def _minmax_kernel(x_ref, mn_ref, mx_ref, *, n_rows, block_rows, num_tiles,
                   tiles_per_slice, num_slices):
    s = pl.program_id(0)
    t = pl.program_id(1)
    g = s * tiles_per_slice + t                # global row-tile index (may overflow)

    @pl.when(t == 0)
    def _():
        mn_ref[...] = jnp.full(mn_ref.shape, jnp.inf, mn_ref.dtype)
        mx_ref[...] = jnp.full(mx_ref.shape, -jnp.inf, mx_ref.dtype)

    def accum(x_for_min, x_for_max):
        mn_ref[...] = jnp.minimum(mn_ref[...], jnp.min(x_for_min))
        mx_ref[...] = jnp.maximum(mx_ref[...], jnp.max(x_for_max))

    x = x_ref[...].astype(jnp.float32)         # in-register upcast of the native-dtype tile

    has_tail = (n_rows % block_rows) != 0                     # static
    has_overflow = (num_slices * tiles_per_slice) != num_tiles  # static
    last_real = num_tiles - 1

    if has_tail:
        # Full tiles: unmasked reduce (no iota/select work).
        @pl.when(g < last_real)
        def _():
            accum(x, x)

        # Only the final real tile pays for masking its padded tail rows.
        @pl.when(g == last_real)
        def _():
            row = lax.broadcasted_iota(jnp.int32, x.shape, 0) + last_real * block_rows
            valid = row < n_rows
            accum(jnp.where(valid, x, jnp.inf), jnp.where(valid, x, -jnp.inf))
    elif has_overflow:
        @pl.when(g < num_tiles)                # skip clamped overflow tiles entirely
        def _():
            accum(x, x)
    else:
        accum(x, x)
    # TODO(synk): optionally accumulate into an (8,128) VMEM scratch (pure VPU mins)
    # and collapse to a scalar only on the last step if pass-1 XLU work ever shows
    # up un-hidden on v7x.


# ----------------------------------------------------------------------------
# Streaming pass 2: (X - min) * inv_range, scalars from SMEM, lane-dense stores
# ----------------------------------------------------------------------------
def _rescale_kernel(stats_ref, x_ref, o_ref):
    mn = stats_ref[0]                          # SMEM scalar: global min
    inv = stats_ref[1]                         # SMEM scalar: 1 / (max - min)
    o_ref[...] = ((x_ref[...].astype(jnp.float32) - mn) * inv).astype(o_ref.dtype)


# ----------------------------------------------------------------------------
# Wrapper
# ----------------------------------------------------------------------------
def _pick_block_rows(rows, cols, max_tile_bytes=_MAX_TILE_BYTES):
    bytes_per_row = cols * 4                   # f32 working bytes
    br = max(1, max_tile_bytes // bytes_per_row)
    if br >= rows:
        return rows
    br = max(8, (br // 8) * 8)                 # keep sublane-aligned tiles
    return min(br, rows)
    # TODO(synk): column tiling for fallback layouts whose single row stripe
    # exceeds the tile budget (cols * 4 * 8 > max_tile_bytes).


def rescale01(x, *, block_rows=None, force_streaming=False):
    """Pallas TPU implementation of Rescale01.forward for arbitrary-rank X."""
    orig_shape = x.shape
    in_dtype = x.dtype
    # Match torch type promotion: floating inputs keep their dtype, integer
    # inputs promote to float32 (torch.div true division).
    out_dtype = in_dtype if jnp.issubdtype(in_dtype, jnp.floating) else jnp.float32

    # Lane-dense relayout: the op is shape agnostic, so view the flattened tensor
    # as (-1, C) with C a multiple of 128 whenever the element count allows it.
    n_elems = x.size
    cols = None
    for c in (1024, 512, 256, 128):
        if n_elems % c == 0:
            cols = c
            break
    if cols is not None:
        x2d = x.reshape(-1, cols)
    else:
        # Fallback: keep the natural trailing dim (masked stores possible, still correct).
        # TODO(synk): pad-to-128 relayout for large tensors whose size is not a multiple of 128.
        x2d = x.reshape(1, -1) if x.ndim <= 1 else x.reshape(-1, orig_shape[-1])
    rows, cols = x2d.shape

    # ---- fused fast path: whole tensor fits comfortably in VMEM --------------------
    if (not force_streaming) and (n_elems * 4 <= _FUSED_LIMIT_BYTES):
        y2d = pl.pallas_call(
            _fused_kernel,
            grid=(1,),
            in_specs=[pl.BlockSpec((rows, cols), lambda i: (0, 0))],
            out_specs=pl.BlockSpec((rows, cols), lambda i: (0, 0)),
            out_shape=jax.ShapeDtypeStruct((rows, cols), out_dtype),
        )(x2d)
        return y2d.reshape(orig_shape)

    # ---- streaming two-pass path ----------------------------------------------------
    if block_rows is None:
        block_rows = _pick_block_rows(rows, cols)
    block_rows = min(block_rows, rows)

    num_tiles = pl.cdiv(rows, block_rows)
    num_slices = 2 if num_tiles >= 2 else 1    # outer "parallel" axis (2 TCs on v7x)
    tiles_per_slice = pl.cdiv(num_tiles, num_slices)

    # pass 1: per-slice min / max -----------------------------------------------------
    minmax = functools.partial(
        _minmax_kernel, n_rows=rows, block_rows=block_rows, num_tiles=num_tiles,
        tiles_per_slice=tiles_per_slice, num_slices=num_slices)

    def x_map(s, t):
        # Clamp overflow tiles of the last slice to a valid block; the kernel's
        # pl.when guards skip their contribution.
        return (jnp.minimum(s * tiles_per_slice + t, num_tiles - 1), 0)

    mn_parts, mx_parts = pl.pallas_call(
        minmax,
        grid=(num_slices, tiles_per_slice),
        in_specs=[pl.BlockSpec((block_rows, cols), x_map)],
        out_specs=(
            pl.BlockSpec((1, 1, 1), lambda s, t: (s, 0, 0)),   # resident per-slice accumulators
            pl.BlockSpec((1, 1, 1), lambda s, t: (s, 0, 0)),
        ),
        out_shape=(
            jax.ShapeDtypeStruct((num_slices, 1, 1), jnp.float32),
            jax.ShapeDtypeStruct((num_slices, 1, 1), jnp.float32),
        ),
        compiler_params=pltpu.CompilerParams(
            dimension_semantics=("parallel", "arbitrary")),
    )(x2d)

    # Tiny XLA glue (only on the large-tensor path): combine slice partials and
    # precompute the range reciprocal once, so pass 2 does one sub + one mul per element.
    mn = jnp.min(mn_parts)
    mx = jnp.max(mx_parts)
    inv = 1.0 / (mx - mn)                      # inf for constant input -> 0*inf = NaN (== torch 0/0)
    stats = jnp.stack([mn, inv]).astype(jnp.float32)

    # pass 2: normalize ----------------------------------------------------------------
    y2d = pl.pallas_call(
        _rescale_kernel,
        grid=(num_tiles,),
        in_specs=[
            pl.BlockSpec(memory_space=pltpu.MemorySpace.SMEM),   # [min, 1/(max-min)]
            pl.BlockSpec((block_rows, cols), lambda i: (i, 0)),
        ],
        out_specs=pl.BlockSpec((block_rows, cols), lambda i: (i, 0)),
        out_shape=jax.ShapeDtypeStruct((rows, cols), out_dtype),
        compiler_params=pltpu.CompilerParams(
            dimension_semantics=("parallel",)),                  # shards across TCs on v7x
    )(stats, x2d)

    return y2d.reshape(orig_shape)


if __name__ == "__main__":
    k0, k1, k2 = jax.random.split(jax.random.PRNGKey(0), 3)

    # 1) Main case: small 4-D tensor (batch=2, channels=4, 16x16). N = 2048 is a
    #    multiple of 1024, so it is re-viewed lane-dense as (2, 1024) and takes the
    #    fused single-kernel path.
    x = jax.random.normal(k0, (2, 4, 16, 16), jnp.float32)
    y = jax.block_until_ready(rescale01(x))
    ref = (x - jnp.min(x)) / (jnp.max(x) - jnp.min(x))
    assert y.shape == x.shape and y.dtype == x.dtype
    assert bool(jnp.all(jnp.isfinite(y)))
    assert bool(jnp.max(jnp.abs(y - ref)) < 1e-5)

    # 2) Force the streaming two-pass path on a ragged row count (33 rows, block_rows=8)
    #    to exercise the 2-slice parallel reduction, overflow-tile clamping, the
    #    pl.when-gated tail mask, and the SMEM stats hand-off.
    x_big = jax.random.normal(k1, (33, 128), jnp.float32)
    y_big = jax.block_until_ready(rescale01(x_big, block_rows=8, force_streaming=True))
    ref_big = (x_big - jnp.min(x_big)) / (jnp.max(x_big) - jnp.min(x_big))
    assert y_big.shape == x_big.shape
    assert bool(jnp.max(jnp.abs(y_big - ref_big)) < 1e-5)

    # 3) Native-dtype streaming: bf16 in -> bf16 out (no wrapper f32 cast).
    x_bf = jax.random.normal(k2, (2, 4, 16, 16), jnp.float32).astype(jnp.bfloat16)
    y_bf = jax.block_until_ready(rescale01(x_bf))
    xf = x_bf.astype(jnp.float32)
    ref_bf = (xf - jnp.min(xf)) / (jnp.max(xf) - jnp.min(xf))
    assert y_bf.dtype == jnp.bfloat16 and y_bf.shape == x_bf.shape
    assert bool(jnp.max(jnp.abs(y_bf.astype(jnp.float32) - ref_bf)) < 2e-2)

    print("KERNEL_OK")
</pallas_src>

<mosaic_0001>
module attributes {stable_mosaic.version = 11 : i64} {
  func.func @_fused_kernel(%arg0: i32, %arg1: memref<2x1024xf32, #tpu.memory_space<vmem>>, %arg2: memref<2x1024xf32, #tpu.memory_space<vmem>>) attributes {dimension_semantics = [#tpu.dimension_semantics<arbitrary>], iteration_bounds = array<i64: 1>, scalar_prefetch = 0 : i64, scratch_operands = 0 : i64, tpu.core_type = #tpu.core_type<tc>, window_params = [{pipeline_mode = #tpu.pipeline_mode<synchronous>, transform_indices = @transform_0, window_bounds = array<i64: 2, 1024>}, {pipeline_mode = #tpu.pipeline_mode<synchronous>, transform_indices = @transform_1, window_bounds = array<i64: 2, 1024>}]} {
    %c0 = arith.constant 0 : index
    %c0_0 = arith.constant 0 : index
    %0 = vector.load %arg1[%c0, %c0_0] : memref<2x1024xf32, #tpu.memory_space<vmem>>, vector<2x1024xf32>
    %1 = vector.shape_cast %0 : vector<2x1024xf32> to vector<1x2x1024xf32>
    %cst = arith.constant dense<0x7F800000> : vector<1xf32>
    %2 = vector.multi_reduction <minimumf>, %1, %cst [1, 2] : vector<1x2x1024xf32> to vector<1xf32>
    %3 = vector.shape_cast %2 : vector<1xf32> to vector<1x1x1xf32>
    %4 = vector.extract %3[0, 0, 0] : f32 from vector<1x1x1xf32>
    %5 = vector.shape_cast %0 : vector<2x1024xf32> to vector<1x2x1024xf32>
    %cst_1 = arith.constant dense<0xFF800000> : vector<1xf32>
    %6 = vector.multi_reduction <maximumf>, %5, %cst_1 [1, 2] : vector<1x2x1024xf32> to vector<1xf32>
    %7 = vector.shape_cast %6 : vector<1xf32> to vector<1x1x1xf32>
    %8 = vector.extract %7[0, 0, 0] : f32 from vector<1x1x1xf32>
    %9 = arith.subf %8, %4 : f32
    %cst_2 = arith.constant 1.000000e+00 : f32
    %10 = arith.divf %cst_2, %9 : f32
    %11 = vector.broadcast %4 : f32 to vector<2x1024xf32>
    %12 = arith.subf %0, %11 : vector<2x1024xf32>
    %13 = vector.broadcast %10 : f32 to vector<2x1024xf32>
    %14 = arith.mulf %12, %13 : vector<2x1024xf32>
    %c0_3 = arith.constant 0 : index
    %c0_4 = arith.constant 0 : index
    %15 = vector.load %arg2[%c0_3, %c0_4] : memref<2x1024xf32, #tpu.memory_space<vmem>>, vector<2x1024xf32>
    tpu.vector_store %arg2[%c0_3, %c0_4], %14 {strides = array<i32>} : memref<2x1024xf32, #tpu.memory_space<vmem>>, vector<2x1024xf32>,
    return
  }
  func.func @transform_0(%arg0: i32) -> (i32, i32) {
    %c0_i32 = arith.constant 0 : i32
    %c0_i32_0 = arith.constant 0 : i32
    %c0_i32_1 = arith.constant 0 : i32
    return %c0_i32, %c0_i32_0 : i32, i32
  }
  func.func @transform_1(%arg0: i32) -> (i32, i32) {
    %c0_i32 = arith.constant 0 : i32
    %c0_i32_0 = arith.constant 0 : i32
    %c0_i32_1 = arith.constant 0 : i32
    return %c0_i32, %c0_i32_0 : i32, i32
  }
}

</mosaic_0001>

<llo_original>
// kernel: tpu_custom_call.1
$region0: #{tpu_custom_call.1}
  #allocation0 [shape = 'u32[]', space=smem, size = 0x4, offset = 0x4, fixed_abs, tag = 'smem constant byte address 0x4 - core index']
  #allocation1 [shape = 'u32[144,128]{1,0:T(1,128)}', space=vmem, size = 0x12000, scoped, tag = 'internal scratch']
  %s0 = inlined_call_operand.hbm [shape: f32[2,1024], index: 0, kind: input, shape index: {}]
  %s1 = inlined_call_operand.hbm [shape: f32[2,1024], index: 1, kind: output, shape index: {}]
  %s2 = sld [smem:[#allocation0]]
  $region18: #{tpu_custom_call.1} parent=0
    _
  %s4 = ssub.s32 1, %s2
  %s5 = scalar_select 0, %s4, %s2
  $region1: #{tpu_custom_call.1} parent=0
    #allocation2 [shape = 'u8[8192]{0}', space=vmem, size = 0x2000, scoped, tag = 'input window, operand 0, single buffered']
    #allocation3 [shape = 's32[1]{0}', space=sflag, size = 0x4, scoped, tag = 'scoped memory for tpu_custom_call.1']
    #allocation4 [shape = 's32[1]{0}', space=sflag, size = 0x4, scoped, tag = 'scoped memory for tpu_custom_call.1']
    #allocation5 [shape = 'u8[8192]{0}', space=vmem, size = 0x2000, scoped, tag = 'output window, operand 0, single buffered']
    %6 = vsyncpa [#allocation3], 0
    %7 = vsyncpa [#allocation4], 0
    // Predicated region
    $region2: #{tpu_custom_call.1} parent=1 // pred_check
      _
    $region3: #{tpu_custom_call.1} parent=1 // pred_check_branch
      %9 = sbr.rel (0) target = $region5
    $region4: #{tpu_custom_call.1} parent=1 // pred_region
      %s11 = ssub.s32 256, 256
      %12 = vsyncadd [#allocation3], %s11
      %s14 = sshll.u32 [#allocation2], 4
      %s15 = int_to_ptr.vmem [resolvable:$true] %s14
      %17 = dma.hbm_to_vmem [thread:$0]  %s0, 256, %s15, [#allocation3]
    $region5: #{tpu_custom_call.1} parent=1 // pred_fallthru
      _
    // Predicated region
    $region6: #{tpu_custom_call.1} parent=1 // pred_check
      _
    $region7: #{tpu_custom_call.1} parent=1 // pred_check_branch
      %19 = sbr.rel (0) target = $region9
    $region8: #{tpu_custom_call.1} parent=1 // pred_region
      %20 = dma.done [#allocation3], 256
    $region9: #{tpu_custom_call.1} parent=1 // pred_fallthru
      _
    %v21 = vld [vmem:[#allocation2] sm:$0xff]
    %v22 = vld [vmem:[#allocation2 + $0x8] sm:$0xff]
    %v25 = vcombine.high %v21, %v21
    %v27 = vunpack.c.l.s4 1983009808
    %v28 = vunpack.c.0.s8 %v27
    %v29 = vlaneseq
    %v30 = vshrl.u32 %v29, 7
    %v31 = vsub.s32 %v28, %v30
    %v32 = vrot.slane %v21, %v31
    %v34 = vunpack.c.l.s4 1983009808
    %v35 = vunpack.c.0.s8 %v34
    %v36 = vlaneseq
    %v37 = vshrl.u32 %v36, 7
    %v38 = vsub.s32 %v35, %v37
    %v39 = vrot.slane %v25, %v38
    %v40 = vcombine.high %v32, %v32
    %v41 = vcombine.high %v39, %v39
    %v42 = vcombine.high %v22, %v22
    %v44 = vunpack.c.l.s4 1983009808
    %v45 = vunpack.c.0.s8 %v44
    %v46 = vlaneseq
    %v47 = vshrl.u32 %v46, 7
    %v48 = vsub.s32 %v45, %v47
    %v49 = vrot.slane %v22, %v48
    %v51 = vunpack.c.l.s4 1983009808
    %v52 = vunpack.c.0.s8 %v51
    %v53 = vlaneseq
    %v54 = vshrl.u32 %v53, 7
    %v55 = vsub.s32 %v52, %v54
    %v56 = vrot.slane %v42, %v55
    %v57 = vcombine.high %v49, %v49
    %v58 = vcombine.high %v56, %v56
    %vm67 = vcmask 1041408
    %v68 = vsel %vm67, %v32, inf
    %v69 = vsel %vm67, %v40, inf
    %v70 = vsel %vm67, %v39, inf
    %v71 = vsel %vm67, %v41, inf
    %v72 = vsel %vm67, %v49, inf
    %v73 = vmin.f32 %v68, %v72
    %v74 = vsel %vm67, %v57, inf
    %v75 = vmin.f32 %v69, %v74
    %v76 = vsel %vm67, %v56, inf
    %v77 = vmin.f32 %v70, %v76
    %v78 = vsel %vm67, %v58, inf
    %v79 = vmin.f32 %v71, %v78
    %v80 = vmin.f32 %v73, %v75
    %v81 = vmin.f32 %v77, %v79
    %v82 = vmin.f32 %v80, %v81
    %83 = vmin.xlane.f32.xlu0 %v82
    %v84 = vpop.xlane.xlu0 %83
    %v85 = vrot.slane %v84, 4
    %v86 = vmin.f32 %v84, %v85
    %v87 = vrot.slane %v86, 2
    %v88 = vmin.f32 %v86, %v87
    %v89 = vrot.slane %v88, 1
    %v90 = vmin.f32 %v88, %v89
    %s91 = vtos %v90
    %v92 = vsel %vm67, %v32, -inf
    %v93 = vsel %vm67, %v40, -inf
    %v94 = vsel %vm67, %v39, -inf
    %v95 = vsel %vm67, %v41, -inf
    %v96 = vsel %vm67, %v49, -inf
    %v97 = vmax.f32 %v92, %v96
    %v98 = vsel %vm67, %v57, -inf
    %v99 = vmax.f32 %v93, %v98
    %v100 = vsel %vm67, %v56, -inf
    %v101 = vmax.f32 %v94, %v100
    %v102 = vsel %vm67, %v58, -inf
    %v103 = vmax.f32 %v95, %v102
    %v104 = vmax.f32 %v97, %v99
    %v105 = vmax.f32 %v101, %v103
    %v106 = vmax.f32 %v104, %v105
    %107 = vmax.xlane.f32.xlu0 %v106
    %v108 = vpop.xlane.xlu0 %107
    %v109 = vrot.slane %v108, 4
    %v110 = vmax.f32 %v108, %v109
    %v111 = vrot.slane %v110, 2
    %v112 = vmax.f32 %v110, %v111
    %v113 = vrot.slane %v112, 1
    %v114 = vmax.f32 %v112, %v113
    %s115 = vtos %v114
    %s116 = ssub.f32 %s115, %s91
    %v117 = vstv %s116
    %v118 = vrcp.pop %v117
    %s119 = vtos %v118
    %v120 = vstv %s91
    %v121 = vsub.f32 %v21, %v120
    %v122 = vsub.f32 %v22, %v120
    %v123 = vstv %s119
    %v124 = vmul.f32 %v121, %v123
    %v125 = vmul.f32 %v122, %v123
    %126 = vst [vmem:[#allocation5] sm:$0xff] %v124
    %127 = vst [vmem:[#allocation5 + $0x8] sm:$0xff] %v125
    // Predicated region
    $region10: #{tpu_custom_call.1} parent=1 // pred_check
      _
    $region11: #{tpu_custom_call.1} parent=1 // pred_check_branch
      %129 = sbr.rel (0) target = $region13
    $region12: #{tpu_custom_call.1} parent=1 // pred_region
      %s131 = ssub.s32 256, 256
      %132 = vsyncadd [#allocation4], %s131
      %s134 = sshll.u32 [#allocation5], 4
      %s135 = int_to_ptr.vmem [resolvable:$true] %s134
      %137 = dma.vmem_to_hbm [thread:$0]  %s135, 256, %s1, [#allocation4]
    $region13: #{tpu_custom_call.1} parent=1 // pred_fallthru
      _
    // Predicated region
    $region14: #{tpu_custom_call.1} parent=1 // pred_check
      _
    $region15: #{tpu_custom_call.1} parent=1 // pred_check_branch
      %139 = sbr.rel (0) target = $region17
    $region16: #{tpu_custom_call.1} parent=1 // pred_region
      %140 = dma.done [#allocation4], 256
    $region17: #{tpu_custom_call.1} parent=1 // pred_fallthru
      _
    %141 = vsyncpa [#allocation3], 1
    %142 = vsyncpa [#allocation4], 1

</llo_original>
